<compile_context>
chip_gen: v7x
topology: tpu7x:2x2x1
jax: 0.10.0
libtpu: 0.0.40
codegen_flags: <defaults>
</compile_context>

<pallas_src>
import jax
import jax.numpy as jnp
from jax.experimental import pallas as pl
from jax.experimental.pallas import tpu as pltpu


# ---------------------------------------------------------------------------
# Kernels
# ---------------------------------------------------------------------------
def _make_kernel(has_mask, has_sub):
    """Linear(c_in -> td) [+ mask-token blend] [+ subject row at seq pos 0].

    Ref shapes (per grid step):
      x_ref:    (TB, L, C)      w_ref:   (C, TD)
      bt_ref:   (2, TD) if has_mask else (1, TD)   -- row0 = bias, row1 = token
      mask_ref: (TB, L, 1)      (only if has_mask)
      sub_ref:  (TB, 1, TD)     (only if has_sub)
      o_ref:    (TB, L+1, TD) if has_sub else (TB, L, TD)
    """

    def kernel(*refs):
        if has_mask and has_sub:
            x_ref, w_ref, bt_ref, mask_ref, sub_ref, o_ref = refs
        elif has_mask:
            x_ref, w_ref, bt_ref, mask_ref, o_ref = refs
        elif has_sub:
            x_ref, w_ref, bt_ref, sub_ref, o_ref = refs
        else:
            x_ref, w_ref, bt_ref, o_ref = refs

        tb, l, c = x_ref.shape
        # One MXU matmul over all TB*L rows of this block.
        x = x_ref[...].reshape(tb * l, c)
        y = jnp.dot(x, w_ref[...], preferred_element_type=jnp.float32)
        y = y + bt_ref[0:1, :]                      # bias
        y = y.reshape(tb, l, -1)

        if has_mask:
            token = bt_ref[1:2, :]                  # (1, TD) -> broadcast
            # Single vselect; matches x*(1-mask) + token*mask for {0,1} masks.
            y = jnp.where(mask_ref[...] != 0.0, token, y)

        if has_sub:
            # Two direct stores: one full-tile pass + one cheap row store.
            o_ref[:, pl.ds(1, l), :] = y.astype(o_ref.dtype)
            o_ref[:, 0:1, :] = sub_ref[...].astype(o_ref.dtype)
        else:
            o_ref[...] = y.astype(o_ref.dtype)

    return kernel


# ---------------------------------------------------------------------------
# Tiling heuristics
# ---------------------------------------------------------------------------
def _pick_tb(batch, seq_len, target_rows=256):
    """Batch elements per grid step: TB*L >= ~256 rows, TB a divisor of B."""
    want = min(batch, max(1, -(-target_rows // seq_len)))
    for cand in range(want, 0, -1):
        if batch % cand == 0:
            return cand
    return 1


def _pick_tile_d(tb, seq_len, out_rows, c_in, d_model, in_item, out_item,
                 budget_bytes=24 * 1024 * 1024):
    """Largest multiple-of-128 divisor of d_model whose *whole* per-step
    working set (double-buffered out + W tile + f32 intermediates + x/mask)
    fits the budget.  Budget is sized for v7x's 64 MiB VMEM; v5e/v6e (128 MiB)
    get comfortably wide tiles from the same number."""
    if d_model % 128 != 0:
        # Full-extent last dim is always legal; pad d_model to 128x upstream
        # for best (unmasked-store) performance.
        return d_model
    rows_mm = tb * seq_len
    fixed = rows_mm * c_in * in_item * 2 + rows_mm * 4 * 2   # x + mask (2-buf)
    best = 128
    for t in range(128, d_model + 1, 128):
        if d_model % t != 0:
            continue
        ws = (tb * out_rows * t * out_item * 2    # output block, double-buffered
              + c_in * t * in_item * 2            # W tile, double-buffered
              + rows_mm * t * 4 * 2               # f32 y + select temporary
              + 4 * t * 4 * 2                     # bias/token/sub tiles
              + fixed)
        if ws <= budget_bytes:
            best = t
    return best


# ---------------------------------------------------------------------------
# pallas_call wrapper
# ---------------------------------------------------------------------------
def _run_embedding(x, w, b, mask, mask_token, sub):
    """x:(B,L,C)  w:(C,D)  b:(D,)  mask:(B,L,1)|None  mask_token:(1,D)  sub:(B,1,D)|None."""
    B, L, C = x.shape
    D = w.shape[1]
    has_mask = mask is not None
    has_sub = sub is not None
    out_rows = L + 1 if has_sub else L

    in_item = jnp.dtype(x.dtype).itemsize
    out_item = in_item

    TB = _pick_tb(B, L)
    td = _pick_tile_d(TB, L, out_rows, C, D, in_item, out_item)
    nd = D // td if D % 128 == 0 else 1
    nb = B // TB
    # Megacore: make sure both TCs (v7x) get at least one grid step.
    if nb * nd < 2 and B >= 2:
        TB = (B + 1) // 2
        while B % TB:
            TB -= 1
        nb = B // TB

    # Fused (bias, mask_token) operand: one small DMA instead of two.
    if has_mask:
        bt = jnp.concatenate(
            [b.reshape(1, D), mask_token.reshape(1, D)], axis=0).astype(x.dtype)
    else:
        bt = b.reshape(1, D).astype(x.dtype)
    bt_rows = bt.shape[0]

    in_specs = [
        pl.BlockSpec((TB, L, C), lambda i, j: (i, 0, 0)),     # x (resident over j)
        pl.BlockSpec((C, td), lambda i, j: (0, j)),           # W tile
        pl.BlockSpec((bt_rows, td), lambda i, j: (0, j)),     # bias [+ token] tile
    ]
    args = [x, w, bt]
    if has_mask:
        in_specs.append(pl.BlockSpec((TB, L, 1), lambda i, j: (i, 0, 0)))
        args.append(mask.astype(x.dtype))
    if has_sub:
        in_specs.append(pl.BlockSpec((TB, 1, td), lambda i, j: (i, 0, j)))
        args.append(sub.astype(x.dtype))

    out_specs = pl.BlockSpec((TB, out_rows, td), lambda i, j: (i, 0, j))

    return pl.pallas_call(
        _make_kernel(has_mask, has_sub),
        out_shape=jax.ShapeDtypeStruct((B, out_rows, D), x.dtype),
        grid_spec=pltpu.PrefetchScalarGridSpec(
            num_scalar_prefetch=0,
            grid=(nb, nd),
            in_specs=in_specs,
            out_specs=out_specs,
        ),
        compiler_params=pltpu.CompilerParams(
            dimension_semantics=("parallel", "parallel"),
            vmem_limit_bytes=48 * 1024 * 1024,
        ),
    )(*args)


# ---------------------------------------------------------------------------
# SubjectEmbedding + DataEmbedding forward
# ---------------------------------------------------------------------------
def _subject_embedding(subject_ids, table, shared_emb, batch_size):
    """jit-safe SubjectEmbedding.forward: (B,) int ids -> (B, 1, D)."""
    D = shared_emb.shape[-1]
    if subject_ids is None:  # mirrors `subject_ids[0] is None` in the PyTorch code
        return jnp.broadcast_to(shared_emb, (batch_size, D))[:, None, :]
    num_subjects = table.shape[0]
    use_shared = jnp.any(subject_ids >= num_subjects)        # global condition
    ids = jnp.clip(subject_ids, 0, num_subjects - 1)
    gathered = table[ids]                                    # (B, D) tiny gather
    shared = jnp.broadcast_to(shared_emb, (batch_size, D))
    return jnp.where(use_shared, shared, gathered)[:, None, :]


def data_embedding_forward(params, x, x_mark=None, subject_ids=None, mask=None):
    """DataEmbedding.forward (joint_train=False); eval-mode dropout (identity)."""
    assert x_mark is None, "temporal/position embeddings are never constructed"
    B, L, _ = x.shape

    sub = None
    if params.get("subject_table") is not None:
        sub = _subject_embedding(subject_ids, params["subject_table"],
                                 params["shared_embedding"], B).astype(x.dtype)

    out = _run_embedding(x, params["w"], params["b"], mask,
                         params["mask_token"], sub)
    return out  # dropout is identity in eval mode


def init_params(key, c_in, d_model, num_subjects):
    ks = jax.random.split(key, 6)
    bound = 1.0 / jnp.sqrt(c_in)
    # nn.Linear: weight (d_model, c_in) ~ U(-1/sqrt(c_in), ...); stored transposed.
    w = jax.random.uniform(ks[0], (c_in, d_model), jnp.float32, -bound, bound)
    b = jax.random.uniform(ks[1], (d_model,), jnp.float32, -bound, bound)
    mask_token = jax.random.normal(ks[2], (1, d_model), jnp.float32)
    subject_table = jax.random.normal(ks[3], (num_subjects, d_model), jnp.float32)
    shared_embedding = jax.random.normal(ks[4], (1, d_model), jnp.float32)
    return {
        "w": w,
        "b": b,
        "mask_token": mask_token,
        "subject_table": subject_table,
        "shared_embedding": shared_embedding,
    }


if __name__ == "__main__":
    # d_model chosen as a multiple of 128 so output stores are lane-dense.
    B, L, C_IN, D_MODEL, NUM_SUBJECTS = 2, 8, 4, 128, 3

    key = jax.random.PRNGKey(0)
    k_p, k_x, k_m = jax.random.split(key, 3)

    params = init_params(k_p, C_IN, D_MODEL, NUM_SUBJECTS)
    x = jax.random.normal(k_x, (B, L, C_IN), jnp.float32)
    subject_ids = jnp.array([0, 2], dtype=jnp.int32)
    mask = (jax.random.uniform(k_m, (B, L, 1)) < 0.3).astype(jnp.float32)

    fwd = jax.jit(data_embedding_forward, static_argnums=())
    out = jax.block_until_ready(fwd(params, x, None, subject_ids, mask))

    # Pure-JAX reference of the full forward (with mask).
    ref_val = x @ params["w"] + params["b"]
    ref_val = jnp.where(mask != 0.0, params["mask_token"], ref_val)
    ref_sub = params["subject_table"][subject_ids][:, None, :]
    ref = jnp.concatenate([ref_sub, ref_val], axis=1)
    assert out.shape == (B, L + 1, D_MODEL)
    assert jnp.allclose(out, ref, atol=1e-5), "mismatch vs reference (mask path)"

    # mask=None fast path (no mask operand, no select inside the kernel).
    out_nm = jax.block_until_ready(
        jax.jit(data_embedding_forward)(params, x, None, subject_ids, None))
    ref_nm = jnp.concatenate([ref_sub, x @ params["w"] + params["b"]], axis=1)
    assert jnp.allclose(out_nm, ref_nm, atol=1e-5), "mismatch vs reference (no-mask path)"

    print("KERNEL_OK")
</pallas_src>

<mosaic_0001>
module attributes {stable_mosaic.version = 11 : i64} {
  func.func @kernel(%arg0: i32, %arg1: i32, %arg2: memref<1x8x4xf32, #tpu.memory_space<vmem>>, %arg3: memref<4x128xf32, #tpu.memory_space<vmem>>, %arg4: memref<2x128xf32, #tpu.memory_space<vmem>>, %arg5: memref<1x8x1xf32, #tpu.memory_space<vmem>>, %arg6: memref<1x1x128xf32, #tpu.memory_space<vmem>>, %arg7: memref<1x9x128xf32, #tpu.memory_space<vmem>>) attributes {dimension_semantics = [#tpu.dimension_semantics<parallel>, #tpu.dimension_semantics<parallel>], iteration_bounds = array<i64: 2, 1>, scalar_prefetch = 0 : i64, scratch_operands = 0 : i64, tpu.core_type = #tpu.core_type<tc>, window_params = [{transform_indices = @transform_0, window_bounds = array<i64: 1, 8, 4>}, {transform_indices = @transform_1, window_bounds = array<i64: 4, 128>}, {transform_indices = @transform_2, window_bounds = array<i64: 2, 128>}, {transform_indices = @transform_3, window_bounds = array<i64: 1, 8, 1>}, {transform_indices = @transform_4, window_bounds = array<i64: 1, 1, 128>}, {transform_indices = @transform_5, window_bounds = array<i64: 1, 9, 128>}]} {
    %c0 = arith.constant 0 : index
    %c0_0 = arith.constant 0 : index
    %c0_1 = arith.constant 0 : index
    %0 = vector.load %arg2[%c0, %c0_0, %c0_1] : memref<1x8x4xf32, #tpu.memory_space<vmem>>, vector<1x8x4xf32>
    %1 = vector.shape_cast %0 : vector<1x8x4xf32> to vector<8x4xf32>
    %c0_2 = arith.constant 0 : index
    %c0_3 = arith.constant 0 : index
    %2 = vector.load %arg3[%c0_2, %c0_3] : memref<4x128xf32, #tpu.memory_space<vmem>>, vector<4x128xf32>
    %cst = arith.constant dense<0.000000e+00> : vector<8x128xf32>
    %3 = tpu.matmul %1, %2, %cst {dimension_numbers = #tpu.dot_dimension_numbers<[1], [0], [0], [1], [0, 0, 1, 1], [], []>} : vector<8x4xf32>, vector<4x128xf32>, vector<8x128xf32> -> vector<8x128xf32>
    %c0_4 = arith.constant 0 : index
    %c0_5 = arith.constant 0 : index
    %4 = vector.load %arg4[%c0_4, %c0_5] : memref<2x128xf32, #tpu.memory_space<vmem>>, vector<1x128xf32>
    %5 = vector.broadcast %4 : vector<1x128xf32> to vector<8x128xf32>
    %6 = arith.addf %3, %5 : vector<8x128xf32>
    %7 = vector.shape_cast %6 : vector<8x128xf32> to vector<1x8x128xf32>
    %c1 = arith.constant 1 : index
    %c0_6 = arith.constant 0 : index
    %8 = vector.load %arg4[%c1, %c0_6] : memref<2x128xf32, #tpu.memory_space<vmem>>, vector<1x128xf32>
    %c0_7 = arith.constant 0 : index
    %c0_8 = arith.constant 0 : index
    %c0_9 = arith.constant 0 : index
    %9 = vector.load %arg5[%c0_7, %c0_8, %c0_9] : memref<1x8x1xf32, #tpu.memory_space<vmem>>, vector<1x8x1xf32>
    %cst_10 = arith.constant 0.000000e+00 : f32
    %10 = vector.broadcast %cst_10 : f32 to vector<1x8x1xf32>
    %11 = arith.cmpf one, %9, %10 : vector<1x8x1xf32>
    %12 = vector.shape_cast %11 : vector<1x8x1xi1> to vector<1x8x1xi1>
    %13 = vector.broadcast %12 : vector<1x8x1xi1> to vector<1x8x128xi1>
    %14 = vector.shape_cast %8 : vector<1x128xf32> to vector<1x1x128xf32>
    %15 = vector.broadcast %14 : vector<1x1x128xf32> to vector<1x8x128xf32>
    %16 = arith.select %13, %15, %7 : vector<1x8x128xi1>, vector<1x8x128xf32>
    %c0_11 = arith.constant 0 : index
    %c1_12 = arith.constant 1 : index
    %c0_13 = arith.constant 0 : index
    %17 = vector.load %arg7[%c0_11, %c1_12, %c0_13] : memref<1x9x128xf32, #tpu.memory_space<vmem>>, vector<1x8x128xf32>
    tpu.vector_store %arg7[%c0_11, %c1_12, %c0_13], %16 {strides = array<i32>} : memref<1x9x128xf32, #tpu.memory_space<vmem>>, vector<1x8x128xf32>,
    %c0_14 = arith.constant 0 : index
    %c0_15 = arith.constant 0 : index
    %c0_16 = arith.constant 0 : index
    %18 = vector.load %arg6[%c0_14, %c0_15, %c0_16] : memref<1x1x128xf32, #tpu.memory_space<vmem>>, vector<1x1x128xf32>
    %c0_17 = arith.constant 0 : index
    %c0_18 = arith.constant 0 : index
    %c0_19 = arith.constant 0 : index
    %19 = vector.load %arg7[%c0_17, %c0_18, %c0_19] : memref<1x9x128xf32, #tpu.memory_space<vmem>>, vector<1x1x128xf32>
    tpu.vector_store %arg7[%c0_17, %c0_18, %c0_19], %18 {strides = array<i32>} : memref<1x9x128xf32, #tpu.memory_space<vmem>>, vector<1x1x128xf32>,
    return
  }
  func.func @transform_0(%arg0: i32, %arg1: i32) -> (i32, i32, i32) {
    %c0_i32 = arith.constant 0 : i32
    %c0_i32_0 = arith.constant 0 : i32
    %c0_i32_1 = arith.constant 0 : i32
    return %arg0, %c0_i32, %c0_i32_0 : i32, i32, i32
  }
  func.func @transform_1(%arg0: i32, %arg1: i32) -> (i32, i32) {
    %c0_i32 = arith.constant 0 : i32
    %c0_i32_0 = arith.constant 0 : i32
    return %c0_i32, %arg1 : i32, i32
  }
  func.func @transform_2(%arg0: i32, %arg1: i32) -> (i32, i32) {
    %c0_i32 = arith.constant 0 : i32
    %c0_i32_0 = arith.constant 0 : i32
    return %c0_i32, %arg1 : i32, i32
  }
  func.func @transform_3(%arg0: i32, %arg1: i32) -> (i32, i32, i32) {
    %c0_i32 = arith.constant 0 : i32
    %c0_i32_0 = arith.constant 0 : i32
    %c0_i32_1 = arith.constant 0 : i32
    return %arg0, %c0_i32, %c0_i32_0 : i32, i32, i32
  }
  func.func @transform_4(%arg0: i32, %arg1: i32) -> (i32, i32, i32) {
    %c0_i32 = arith.constant 0 : i32
    %c0_i32_0 = arith.constant 0 : i32
    return %arg0, %c0_i32, %arg1 : i32, i32, i32
  }
  func.func @transform_5(%arg0: i32, %arg1: i32) -> (i32, i32, i32) {
    %c0_i32 = arith.constant 0 : i32
    %c0_i32_0 = arith.constant 0 : i32
    return %arg0, %c0_i32, %arg1 : i32, i32, i32
  }
}

</mosaic_0001>

<llo_original>
// kernel: data_embedding_forward.1
$region0: #{data_embedding_forward.1}
  #allocation0 [shape = 'u32[]', space=smem, size = 0x4, offset = 0x4, fixed_abs, tag = 'smem constant byte address 0x4 - core index']
  #allocation1 [shape = 'u32[144,128]{1,0:T(1,128)}', space=vmem, size = 0x12000, scoped, tag = 'internal scratch']
  %s0 = inlined_call_operand.vmem [shape: f32[2,8,4], index: 0, kind: input, shape index: {}]
  %s1 = inlined_call_operand.vmem [shape: f32[4,128], index: 1, kind: input, shape index: {}]
  %s2 = inlined_call_operand.vmem [shape: f32[2,128], index: 2, kind: input, shape index: {}]
  %s3 = inlined_call_operand.vmem [shape: f32[2,8,1], index: 3, kind: input, shape index: {}]
  %s4 = inlined_call_operand.vmem [shape: f32[2,1,128], index: 4, kind: input, shape index: {}]
  %s5 = inlined_call_operand.vmem [shape: f32[2,9,128], index: 5, kind: output, shape index: {}]
  %s6 = sld [smem:[#allocation0]]
  $region53: #{data_embedding_forward.1} parent=0
    _
  %s8 = ssub.s32 1, %s6
  %s9 = scalar_select 0, %s8, %s6
  loop: start=0, step=1, limit=4
  $region2: #{data_embedding_forward.1} parent=0 // loop_pre_header
    _
  $region3: #{data_embedding_forward.1} parent=0 // loop_header
    %s11 = sphi 0, %s15
    %p12 = scmp.ge.s32.totalorder %s11, 4
    %s18 = sphi 0, %s30
    %s19 = sphi 0, %s26
    %s20 = sphi 0, %s18
    %s21 = sphi 0, %s19
    %s22 = sphi 0, %s20
    %s23 = sphi 0, %s21
    %s33 = sphi 0, %s35
    %s36 = sphi 0, %s33
    %s37 = sphi 0, %s36
    %s53 = sphi 0, %s37
    %s59 = sphi 0, %s61
    %s62 = sphi 0, %s59
    %s63 = sphi 0, %s62
    %s79 = sphi 0, %s63
    %s85 = sphi 0, %s87
    %s88 = sphi 0, %s85
    %s89 = sphi 0, %s88
    %s105 = sphi 0, %s89
    %s111 = sphi 0, %s113
    %s114 = sphi 0, %s111
    %s115 = sphi 0, %s114
    %s131 = sphi 0, %s115
    %s139 = sphi 0, %s141
    %s142 = sphi 0, %s139
    %s143 = sphi 0, %s142
    %s159 = sphi 0, %s143
    %s167 = sphi 0, %s169
    %s170 = sphi 0, %s167
    %s171 = sphi 0, %s170
    %s187 = sphi 0, %s171
  $region4: #{data_embedding_forward.1} parent=0 // loop_header_branch
    %14 = sbr.rel (%p12) target = $region8
  $region5: #{data_embedding_forward.1} parent=0 // loop_body
    %s16 = ssub.s32 %s11, 1
    %s17 = ssub.s32 %s11, 2
    %s24 = sadd.s32 1, %s19
    %p25 = scmp.ge.s32.totalorder %s24, 1
    %s26 = scalar_select %p25, 0, %s24
    %s27 = sadd.s32 1, %s18
    %s28 = scalar_select %p25, %s27, %s18
    %p29 = scmp.ge.s32.totalorder %s28, 2
    %s30 = scalar_select %p29, 0, %s28
    %s31 = ssub.s32 %s18, %s30
    %p32 = scmp.eq.s32.totalorder %s31, 0
    %s34 = sadd.s32 %s33, 1
    %s35 = scalar_select %p32, %s33, %s34
    %p38 = pneg %p32
    %p39 = scmp.eq.s32.totalorder %s11, 1
    %p40 = por %p38, %p39
    %p41 = scmp.ne.s32.totalorder %s33, %s36
    %p42 = scmp.eq.s32.totalorder %s11, 0
    %p43 = por %p41, %p42
    %p44 = scmp.ne.s32.totalorder %s33, %s36
    %p45 = scmp.eq.s32.totalorder %s16, 1
    %p46 = por %p44, %p45
    %p47 = scmp.ne.s32.totalorder %s36, %s37
    %p48 = scmp.eq.s32.totalorder %s16, 0
    %p49 = por %p47, %p48
    %p50 = scmp.ne.s32.totalorder %s36, %s37
    %p51 = scmp.eq.s32.totalorder %s17, 1
    %p52 = por %p50, %p51
    %p54 = scmp.ne.s32.totalorder %s37, %s53
    %p55 = scmp.eq.s32.totalorder %s17, 0
    %p56 = por %p54, %p55
    %s57 = ssub.s32 %s19, %s26
    %p58 = scmp.eq.s32.totalorder %s57, 0
    %s60 = sadd.s32 %s59, 1
    %s61 = scalar_select %p58, %s59, %s60
    %p64 = pneg %p58
    %p65 = scmp.eq.s32.totalorder %s11, 1
    %p66 = por %p64, %p65
    %p67 = scmp.ne.s32.totalorder %s59, %s62
    %p68 = scmp.eq.s32.totalorder %s11, 0
    %p69 = por %p67, %p68
    %p70 = scmp.ne.s32.totalorder %s59, %s62
    %p71 = scmp.eq.s32.totalorder %s16, 1
    %p72 = por %p70, %p71
    %p73 = scmp.ne.s32.totalorder %s62, %s63
    %p74 = scmp.eq.s32.totalorder %s16, 0
    %p75 = por %p73, %p74
    %p76 = scmp.ne.s32.totalorder %s62, %s63
    %p77 = scmp.eq.s32.totalorder %s17, 1
    %p78 = por %p76, %p77
    %p80 = scmp.ne.s32.totalorder %s63, %s79
    %p81 = scmp.eq.s32.totalorder %s17, 0
    %p82 = por %p80, %p81
    %s83 = ssub.s32 %s19, %s26
    %p84 = scmp.eq.s32.totalorder %s83, 0
    %s86 = sadd.s32 %s85, 1
    %s87 = scalar_select %p84, %s85, %s86
    %p90 = pneg %p84
    %p91 = scmp.eq.s32.totalorder %s11, 1
    %p92 = por %p90, %p91
    %p93 = scmp.ne.s32.totalorder %s85, %s88
    %p94 = scmp.eq.s32.totalorder %s11, 0
    %p95 = por %p93, %p94
    %p96 = scmp.ne.s32.totalorder %s85, %s88
    %p97 = scmp.eq.s32.totalorder %s16, 1
    %p98 = por %p96, %p97
    %p99 = scmp.ne.s32.totalorder %s88, %s89
    %p100 = scmp.eq.s32.totalorder %s16, 0
    %p101 = por %p99, %p100
    %p102 = scmp.ne.s32.totalorder %s88, %s89
    %p103 = scmp.eq.s32.totalorder %s17, 1
    %p104 = por %p102, %p103
    %p106 = scmp.ne.s32.totalorder %s89, %s105
    %p107 = scmp.eq.s32.totalorder %s17, 0
    %p108 = por %p106, %p107
    %s109 = ssub.s32 %s18, %s30
    %p110 = scmp.eq.s32.totalorder %s109, 0
    %s112 = sadd.s32 %s111, 1
    %s113 = scalar_select %p110, %s111, %s112
    %p116 = pneg %p110
    %p117 = scmp.eq.s32.totalorder %s11, 1
    %p118 = por %p116, %p117
    %p119 = scmp.ne.s32.totalorder %s111, %s114
    %p120 = scmp.eq.s32.totalorder %s11, 0
    %p121 = por %p119, %p120
    %p122 = scmp.ne.s32.totalorder %s111, %s114
    %p123 = scmp.eq.s32.totalorder %s16, 1
    %p124 = por %p122, %p123
    %p125 = scmp.ne.s32.totalorder %s114, %s115
    %p126 = scmp.eq.s32.totalorder %s16, 0
    %p127 = por %p125, %p126
    %p128 = scmp.ne.s32.totalorder %s114, %s115
    %p129 = scmp.eq.s32.totalorder %s17, 1
    %p130 = por %p128, %p129
    %p132 = scmp.ne.s32.totalorder %s115, %s131
    %p133 = scmp.eq.s32.totalorder %s17, 0
    %p134 = por %p132, %p133
    %s135 = ssub.s32 %s18, %s30
    %s136 = ssub.s32 %s19, %s26
    %s137 = sor.u32 %s135, %s136
    %p138 = scmp.eq.s32.totalorder %s137, 0
    %s140 = sadd.s32 %s139, 1
    %s141 = scalar_select %p138, %s139, %s140
    %p144 = pneg %p138
    %p145 = scmp.eq.s32.totalorder %s11, 1
    %p146 = por %p144, %p145
    %p147 = scmp.ne.s32.totalorder %s139, %s142
    %p148 = scmp.eq.s32.totalorder %s11, 0
    %p149 = por %p147, %p148
    %p150 = scmp.ne.s32.totalorder %s139, %s142
    %p151 = scmp.eq.s32.totalorder %s16, 1
    %p152 = por %p150, %p151
    %p153 = scmp.ne.s32.totalorder %s142, %s143
    %p154 = scmp.eq.s32.totalorder %s16, 0
    %p155 = por %p153, %p154
    %p156 = scmp.ne.s32.totalorder %s142, %s143
    %p157 = scmp.eq.s32.totalorder %s17, 1
    %p158 = por %p156, %p157
    %p160 = scmp.ne.s32.totalorder %s143, %s159
    %p161 = scmp.eq.s32.totalorder %s17, 0
    %p162 = por %p160, %p161
    %s163 = ssub.s32 %s18, %s30
    %s164 = ssub.s32 %s19, %s26
    %s165 = sor.u32 %s163, %s164
    %p166 = scmp.eq.s32.totalorder %s165, 0
    %s168 = sadd.s32 %s167, 1
    %s169 = scalar_select %p166, %s167, %s168
    %p172 = pneg %p166
    %p173 = scmp.eq.s32.totalorder %s11, 1
    %p174 = por %p172, %p173
    %p175 = scmp.ne.s32.totalorder %s167, %s170
    %p176 = scmp.eq.s32.totalorder %s11, 0
    %p177 = por %p175, %p176
    %p178 = scmp.ne.s32.totalorder %s167, %s170
    %p179 = scmp.eq.s32.totalorder %s16, 1
    %p180 = por %p178, %p179
    %p181 = scmp.ne.s32.totalorder %s170, %s171
    %p182 = scmp.eq.s32.totalorder %s16, 0
    %p183 = por %p181, %p182
    %p184 = scmp.ne.s32.totalorder %s170, %s171
    %p185 = scmp.eq.s32.totalorder %s17, 1
    %p186 = por %p184, %p185
    %p188 = scmp.ne.s32.totalorder %s171, %s187
    %p189 = scmp.eq.s32.totalorder %s17, 0
    %p190 = por %p188, %p189
    %p191 = scmp.le.s32.totalorder 1, %s11
    %p192 = scmp.lt.s32.totalorder %s11, 3
    %p193 = pnand %p191, %p192
    %p194 = pneg %p193
    // Predicated region
    $region9: #{data_embedding_forward.1} parent=5 // pred_check
      _
    $region10: #{data_embedding_forward.1} parent=5 // pred_check_branch
      %196 = sbr.rel (%p193) target = $region12
    $region11: #{data_embedding_forward.1} parent=5 // pred_region
      %s197 = ssub.s32 %s11, 1
      // Predicated region
      $region13: #{data_embedding_forward.1} parent=11 // pred_check
        %p198 = pneg %p75
      $region14: #{data_embedding_forward.1} parent=11 // pred_check_branch
        %200 = sbr.rel (%p198) target = $region16
      $region15: #{data_embedding_forward.1} parent=11 // pred_region
        %p201 = scmp.lt.s32.totalorder %s21, 0
        %s202 = scalar_select %p201, %s21, 0
        %s203 = smul.addr %s202, 4
        %s204 = scalar_lea.vmem %s1, %s203
      $region16: #{data_embedding_forward.1} parent=11 // pred_fallthru
        _
      // Predicated region
      $region17: #{data_embedding_forward.1} parent=11 // pred_check
        %p205 = pneg %p101
      $region18: #{data_embedding_forward.1} parent=11 // pred_check_branch
        %207 = sbr.rel (%p205) target = $region20
      $region19: #{data_embedding_forward.1} parent=11 // pred_region
        %p208 = scmp.lt.s32.totalorder %s21, 0
        %s209 = scalar_select %p208, %s21, 0
        %s210 = smul.addr %s209, 2
        %s211 = scalar_lea.vmem %s2, %s210
      $region20: #{data_embedding_forward.1} parent=11 // pred_fallthru
        _
    $region12: #{data_embedding_forward.1} parent=5 // pred_fallthru
      _
    %p212 = scmp.lt.s32.totalorder %s11, 2
    // Predicated region
    $region21: #{data_embedding_forward.1} parent=5 // pred_check
      %p213 = pneg %p212
    $region22: #{data_embedding_forward.1} parent=5 // pred_check_branch
      %215 = sbr.rel (%p213) target = $region24
    $region23: #{data_embedding_forward.1} parent=5 // pred_region
      // Predicated region
      $region25: #{data_embedding_forward.1} parent=23 // pred_check
        %p216 = pneg %p43
      $region26: #{data_embedding_forward.1} parent=23 // pred_check_branch
        %218 = sbr.rel (%p216) target = $region28
      $region27: #{data_embedding_forward.1} parent=23 // pred_region
        %p219 = scmp.lt.s32.totalorder %s18, 1
        %s220 = scalar_select %p219, %s18, 1
        %s221 = smul.addr %s220, 8
        %s222 = scalar_lea.vmem %s0, %s221
      $region28: #{data_embedding_forward.1} parent=23 // pred_fallthru
        _
      // Predicated region
      $region29: #{data_embedding_forward.1} parent=23 // pred_check
        %p223 = pneg %p121
      $region30: #{data_embedding_forward.1} parent=23 // pred_check_branch
        %225 = sbr.rel (%p223) target = $region32
      $region31: #{data_embedding_forward.1} parent=23 // pred_region
        %p226 = scmp.lt.s32.totalorder %s18, 1
        %s227 = scalar_select %p226, %s18, 1
        %s228 = smul.addr %s227, 8
        %s229 = scalar_lea.vmem %s3, %s228
      $region32: #{data_embedding_forward.1} parent=23 // pred_fallthru
        _
      // Predicated region
      $region33: #{data_embedding_forward.1} parent=23 // pred_check
        %p230 = pneg %p149
      $region34: #{data_embedding_forward.1} parent=23 // pred_check_branch
        %232 = sbr.rel (%p230) target = $region36
      $region35: #{data_embedding_forward.1} parent=23 // pred_region
        %p233 = scmp.lt.s32.totalorder %s18, 1
        %s234 = scalar_select %p233, %s18, 1
        %p235 = scmp.lt.s32.totalorder %s19, 0
        %s236 = scalar_select %p235, %s19, 0
        %s237 = sadd.s32 %s236, %s234
        %s238 = scalar_lea.vmem %s4, %s237
      $region36: #{data_embedding_forward.1} parent=23 // pred_fallthru
        _
    $region24: #{data_embedding_forward.1} parent=5 // pred_fallthru
      _
    %p239 = scmp.le.s32.totalorder 1, %s11
    %p240 = scmp.lt.s32.totalorder %s11, 3
    %p241 = pnand %p239, %p240
    %p242 = pneg %p241
    // Predicated region
    $region37: #{data_embedding_forward.1} parent=5 // pred_check
      _
    $region38: #{data_embedding_forward.1} parent=5 // pred_check_branch
      %244 = sbr.rel (%p241) target = $region40
    $region39: #{data_embedding_forward.1} parent=5 // pred_region
      %s245 = ssub.s32 %s11, 1
      %p246 = scmp.lt.s32.totalorder %s20, 1
      %s247 = scalar_select %p246, %s20, 1
      %s248 = smul.addr %s247, 8
      %s249 = scalar_lea.vmem %s0, %s248
      %p250 = pneg %p49
      %p251 = pneg %p46
      %p252 = scmp.lt.s32.totalorder %s21, 0
      %s253 = scalar_select %p252, %s21, 0
      %s254 = smul.addr %s253, 4
      %s255 = scalar_lea.vmem %s1, %s254
      %p256 = pneg %p75
      %p257 = pneg %p72
      %p258 = scmp.lt.s32.totalorder %s21, 0
      %s259 = scalar_select %p258, %s21, 0
      %s260 = smul.addr %s259, 2
      %s261 = scalar_lea.vmem %s2, %s260
      %p262 = pneg %p101
      %p263 = pneg %p98
      %p264 = scmp.lt.s32.totalorder %s20, 1
      %s265 = scalar_select %p264, %s20, 1
      %s266 = smul.addr %s265, 8
      %s267 = scalar_lea.vmem %s3, %s266
      %p268 = pneg %p127
      %p269 = pneg %p124
      %p270 = scmp.lt.s32.totalorder %s20, 1
      %s271 = scalar_select %p270, %s20, 1
      %p272 = scmp.lt.s32.totalorder %s21, 0
      %s273 = scalar_select %p272, %s21, 0
      %s274 = sadd.s32 %s273, %s271
      %s275 = scalar_lea.vmem %s4, %s274
      %p276 = pneg %p155
      %p277 = pneg %p152
      %p278 = pneg %p183
      %p279 = pneg %p180
      %p280 = scmp.lt.s32.totalorder %s20, 1
      %s281 = scalar_select %p280, %s20, 1
      %p282 = scmp.lt.s32.totalorder %s21, 0
      %s283 = scalar_select %p282, %s21, 0
      %s284 = smul.addr %s281, 2
      %s285 = sadd.s32 %s283, %s284
      %s286 = smul.addr %s285, 8
      %s287 = scalar_lea.vmem %s5, %s286
      %p288 = scmp.lt.s32.totalorder %s20, 1
      %s289 = scalar_select %p288, %s20, 1
      %s290 = smul.addr %s289, 8
      %s291 = scalar_lea.vmem %s0, %s290
      %p292 = scmp.lt.s32.totalorder %s21, 0
      %s293 = scalar_select %p292, %s21, 0
      %s294 = smul.addr %s293, 4
      %s295 = scalar_lea.vmem %s1, %s294
      %p296 = scmp.lt.s32.totalorder %s21, 0
      %s297 = scalar_select %p296, %s21, 0
      %s298 = smul.addr %s297, 2
      %s299 = scalar_lea.vmem %s2, %s298
      %p300 = scmp.lt.s32.totalorder %s20, 1
      %s301 = scalar_select %p300, %s20, 1
      %s302 = smul.addr %s301, 8
      %s303 = scalar_lea.vmem %s3, %s302
      %p304 = scmp.lt.s32.totalorder %s20, 1
      %s305 = scalar_select %p304, %s20, 1
      %p306 = scmp.lt.s32.totalorder %s21, 0
      %s307 = scalar_select %p306, %s21, 0
      %s308 = sadd.s32 %s307, %s305
      %s309 = scalar_lea.vmem %s4, %s308
      %p310 = scmp.lt.s32.totalorder %s20, 1
      %s311 = scalar_select %p310, %s20, 1
      %p312 = scmp.lt.s32.totalorder %s21, 0
      %s313 = scalar_select %p312, %s21, 0
      %s314 = smul.addr %s311, 2
      %s315 = sadd.s32 %s313, %s314
      %s316 = smul.addr %s315, 8
      %s317 = scalar_lea.vmem %s5, %s316
      %v318 = vld [vmem:[%s291] sm:$0xff]
      %v319 = vld [vmem:[%s295] sm:$0xf]
      %v320 = vld [vmem:[%s299] sm:$0x1]
      %v321 = vlaneseq
      %v322 = vshrl.u32 %v321, 7
      %v323 = vsub.s32 0, %v322
      %v324 = vrot.slane %v320, %v323
      %vm325 = vcmask 31744
      %v327 = vsel %vm325, %v318, 0
      %vm329 = vcmask 1043456
      %v331 = vsel %vm329, %v319, 0
      %333 = vmatprep.subr.mxu0 0.0
      %334 = vmatpush1.msra.mxu0 %v331
      %335 = vmatprep.subr.mxu0 0.0
      %336 = vmatpush1.msra.mxu0 0.0
      %337 = vmatprep.subr.mxu0 0.0
      %338 = vmatpush1.msra.mxu0 0.0
      %339 = vmatprep.subr.mxu0 0.0
      %340 = vmatpush1.msra.mxu0 0.0
      %341 = vmatprep.subr.mxu0 0.0
      %342 = vmatpush1.msra.mxu0 0.0
      %343 = vmatprep.subr.mxu0 0.0
      %344 = vmatpush1.msra.mxu0 0.0
      %345 = vmatprep.subr.mxu0 0.0
      %346 = vmatpush1.msra.mxu0 0.0
      %347 = vmatprep.subr.mxu0 0.0
      %348 = vmatpush1.msra.mxu0 0.0
      %349 = vmatprep.subr.mxu0 0.0
      %350 = vmatpush1.msra.mxu0 0.0
      %351 = vmatprep.subr.mxu0 0.0
      %352 = vmatpush1.msra.mxu0 0.0
      %353 = vmatprep.subr.mxu0 0.0
      %354 = vmatpush1.msra.mxu0 0.0
      %355 = vmatprep.subr.mxu0 0.0
      %356 = vmatpush1.msra.mxu0 0.0
      %357 = vmatprep.subr.mxu0 0.0
      %358 = vmatpush1.msra.mxu0 0.0
      %359 = vmatprep.subr.mxu0 0.0
      %360 = vmatpush1.msra.mxu0 0.0
      %361 = vmatprep.subr.mxu0 0.0
      %362 = vmatpush1.msra.mxu0 0.0
      %363 = vmatprep.subr.mxu0 0.0
      %364 = vmatpush1.msra.mxu0 0.0
      %365 = vmatprep.subr.mxu0 0.0
      %366 = vmatpush1.msra.mxu0 0.0
      %367 = vmatprep.subr.mxu0 0.0
      %368 = vmatpush1.msra.mxu0 0.0
      %369 = vmatprep.subr.mxu0 0.0
      %370 = vmatpush1.msra.mxu0 0.0
      %371 = vmatprep.subr.mxu0 0.0
      %372 = vmatpush1.msra.mxu0 0.0
      %373 = vmatprep.subr.mxu0 0.0
      %374 = vmatpush1.msra.mxu0 0.0
      %375 = vmatprep.subr.mxu0 0.0
      %376 = vmatpush1.msra.mxu0 0.0
      %377 = vmatprep.subr.mxu0 0.0
      %378 = vmatpush1.msra.mxu0 0.0
      %379 = vmatprep.subr.mxu0 0.0
      %380 = vmatpush1.msra.mxu0 0.0
      %381 = vmatprep.subr.mxu0 0.0
      %382 = vmatpush1.msra.mxu0 0.0
      %383 = vmatprep.subr.mxu0 0.0
      %384 = vmatpush1.msra.mxu0 0.0
      %385 = vmatprep.subr.mxu0 0.0
      %386 = vmatpush1.msra.mxu0 0.0
      %387 = vmatprep.subr.mxu0 0.0
      %388 = vmatpush1.msra.mxu0 0.0
      %389 = vmatprep.subr.mxu0 0.0
      %390 = vmatpush1.msra.mxu0 0.0
      %391 = vmatprep.subr.mxu0 0.0
      %392 = vmatpush1.msra.mxu0 0.0
      %393 = vmatprep.subr.mxu0 0.0
      %394 = vmatpush1.msra.mxu0 0.0
      %395 = vmatprep.subr.mxu0 0.0
      %396 = vmatpush1.msra.mxu0 0.0
      %397 = vmatprep.mubr.f32.mxu0 0.0
      %398 = vmatmul.mubr.f32.gmra.mrb[0].mxu0 %v327
      %v399 = vpop.f32.mrb[0].mxu0
      %v400 = vadd.f32 %v324, %v399
      %v401 = vpop.f32.mrb[0].mxu0
      %402 = vdwg.mxu0
      %v403 = vld [vmem:[%s299 + $0x1] sm:$0x1]
      %v404 = vld [vmem:[%s303] sm:$0xff]
      %vm405 = vcmp.ne.f32.partialorder %v404, 0.0
      %v406 = vsel %vm405, 1, 0
      %407 = vset.pattern.permute.xlu0 0
      %408 = vperm.xlu0 %407, %v406
      %v409 = vpop.permute.xlu0 %408
      %vm410 = vcmp.eq.s32.totalorder %v409, 1
      %v411 = vlaneseq
      %v412 = vshrl.u32 %v411, 7
      %v413 = vsub.s32 0, %v412
      %v414 = vrot.slane %v403, %v413
      %v415 = vsel %vm410, %v414, %v400
      %416 = vst [vmem:[%s317 + $0x1] sm:$0xff] %v415
      %v417 = vld [vmem:[%s309] sm:$0x1]
      %418 = vst [vmem:[%s317] sm:$0x1] %v417
      %p419 = scmp.lt.s32.totalorder %s20, 1
      %s420 = scalar_select %p419, %s20, 1
      %p421 = scmp.lt.s32.totalorder %s21, 0
      %s422 = scalar_select %p421, %s21, 0
      %s423 = smul.addr %s420, 2
      %s424 = sadd.s32 %s422, %s423
      %s425 = smul.addr %s424, 8
      %s426 = scalar_lea.vmem %s5, %s425
      // Predicated region
      $region41: #{data_embedding_forward.1} parent=39 // pred_check
        %p427 = pneg %p180
      $region42: #{data_embedding_forward.1} parent=39 // pred_check_branch
        %429 = sbr.rel (%p427) target = $region44
      $region43: #{data_embedding_forward.1} parent=39 // pred_region
        _
      $region44: #{data_embedding_forward.1} parent=39 // pred_fallthru
        _
    $region40: #{data_embedding_forward.1} parent=5 // pred_fallthru
      _
    %p430 = scmp.le.s32.totalorder 2, %s11
    // Predicated region
    $region45: #{data_embedding_forward.1} parent=5 // pred_check
      %p431 = pneg %p430
    $region46: #{data_embedding_forward.1} parent=5 // pred_check_branch
      %433 = sbr.rel (%p431) target = $region48
    $region47: #{data_embedding_forward.1} parent=5 // pred_region
      %s434 = ssub.s32 %s11, 2
      // Predicated region
      $region49: #{data_embedding_forward.1} parent=47 // pred_check
        %p435 = pneg %p186
      $region50: #{data_embedding_forward.1} parent=47 // pred_check_branch
        %437 = sbr.rel (%p435) target = $region52
      $region51: #{data_embedding_forward.1} parent=47 // pred_region
        %p438 = scmp.lt.s32.totalorder %s22, 1
        %s439 = scalar_select %p438, %s22, 1
        %p440 = scmp.lt.s32.totalorder %s23, 0
        %s441 = scalar_select %p440, %s23, 0
        %s442 = smul.addr %s439, 2
        %s443 = sadd.s32 %s441, %s442
        %s444 = smul.addr %s443, 8
        %s445 = scalar_lea.vmem %s5, %s444
      $region52: #{data_embedding_forward.1} parent=47 // pred_fallthru
        _
    $region48: #{data_embedding_forward.1} parent=5 // pred_fallthru
      _
  $region6: #{data_embedding_forward.1} parent=0 // loop_footer
    %s15 = sadd.s32 1, %s11
  $region7: #{data_embedding_forward.1} parent=0 // loop_footer_branch
    %10 = sbr.rel target = $region3
  $region8: #{data_embedding_forward.1} parent=0 // loop_exit
    _

</llo_original>
